<compile_context>
chip_gen: v7x
topology: tpu7x:2x2x1
jax: 0.10.0
libtpu: 0.0.40
codegen_flags: <defaults>
</compile_context>

<pallas_src>
import functools
import math

import jax
import jax.numpy as jnp
from jax import lax
from jax.experimental import pallas as pl
from jax.experimental.pallas import tpu as pltpu

_I32_MIN = -0x80000000
_I32_MAX = 0x7FFFFFFF


def _ordered_key(x, col, packed: bool):
    """int32 key whose signed order matches the per-element value order of `x`.

    packed=True additionally ORs (0xFFFF - column) into the low 16 bits.  The
    wrapper only enables this for dtypes whose ordering information fits in the
    top 16 bits (bf16, 8/16-bit ints) and d <= 0xFFFF, so packed keys are
    unique within a row, can never equal INT32_MIN (the extraction sentinel),
    and tie-break to the lowest column exactly like torch.topk.
    """
    dtype = x.dtype
    idx_bits = jnp.int32(0xFFFF) - col          # in [1, 0xFFFF] when d <= 0xFFFF

    if jnp.issubdtype(dtype, jnp.floating):
        xf = x.astype(jnp.float32)              # exact for bf16 / f16 / f8
        bits = pltpu.bitcast(xf, jnp.int32)
        key = jnp.where(bits >= 0, bits, bits ^ jnp.int32(_I32_MAX))
        key = jnp.where(jnp.isnan(xf), jnp.int32(_I32_MAX), key)   # NaN sorts largest
        if packed:   # bf16 only: all ordering info lives in the top 16 f32 bits
            key = (key & jnp.int32(-0x10000)) | idx_bits
        return key

    if jnp.issubdtype(dtype, jnp.unsignedinteger):
        if dtype == jnp.uint32:
            return pltpu.bitcast(x, jnp.int32) ^ jnp.int32(_I32_MIN)
        v = x.astype(jnp.int32)
        if packed:   # recenter so the value occupies the signed top 16 bits
            return ((v - jnp.int32(0x8000)) << 16) | idx_bits
        return v

    v = x.astype(jnp.int32)                     # signed integers
    if packed:
        return (v << 16) | idx_bits
    return v


def _argmax_select(key, col, k: int, packed: bool, needs_guard: bool):
    """k sequential argmax extractions; returns a (tm, d) bool keep-mask."""
    tm, d = key.shape
    sentinel = jnp.int32(_I32_MIN)              # strictly below every real key

    if packed:
        # unique keys -> the row max identifies exactly one new column; 1 XLU
        # reduce per extracted element, no index reduce, no guard needed.
        def body(_, selected):
            masked = jnp.where(selected, sentinel, key)
            row_max = jnp.max(masked, axis=-1, keepdims=True)
            return selected | (key == row_max)
    else:
        def body(_, selected):
            masked = jnp.where(selected, sentinel, key)
            row_max = jnp.max(masked, axis=-1, keepdims=True)
            is_max = masked == row_max
            if needs_guard:   # int32/uint32: a real key can equal the sentinel
                is_max = is_max & jnp.logical_not(selected)
            first = jnp.min(jnp.where(is_max, col, jnp.int32(d)),
                            axis=-1, keepdims=True)     # lowest tied column
            return selected | (col == first)

    unroll = True if k <= 16 else 4
    return lax.fori_loop(0, k, body, jnp.zeros((tm, d), jnp.bool_), unroll=unroll)


def _radix_select(key, col, k: int, packed: bool):
    """Top-k mask via MSB-first bit-plane counting; O(32) lane reduces, any k."""
    tm, d = key.shape
    # bit pattern whose *unsigned* order equals the value order
    ukey = key ^ jnp.int32(_I32_MIN)
    zeros = jnp.zeros((tm, 1), jnp.int32)
    # counts carried in f32 (exact for d < 2**24); f32 lane-sum is the safe path
    rem0 = jnp.full((tm, 1), float(k), jnp.float32)

    def key_body(i, carry):
        prefix, decided, rem = carry
        b = 31 - i
        bit = jnp.left_shift(jnp.int32(1), b)
        alive = (ukey & decided) == prefix
        hot = alive & ((ukey & bit) != 0)
        cnt = jnp.sum(jnp.where(hot, 1.0, 0.0), axis=-1, keepdims=True)
        take = cnt >= rem
        prefix = jnp.where(take, prefix | bit, prefix)
        rem = jnp.where(take, rem, rem - cnt)
        return prefix, decided | bit, rem

    prefix, _, rem = lax.fori_loop(0, 32, key_body, (zeros, zeros, rem0), unroll=4)
    thresh = prefix ^ jnp.int32(_I32_MIN)       # signed key of the k-th largest

    if packed:                                  # unique keys -> no ties possible
        return key >= thresh

    above = key > thresh
    equal = key == thresh
    # tie fix-up: keep the `rem` lowest columns among threshold-equal entries
    nbits = max(1, (d - 1).bit_length())

    def idx_body(i, carry):
        iprefix, idecided, irem = carry
        b = nbits - 1 - i
        bit = jnp.left_shift(jnp.int32(1), b)
        alive = equal & ((col & idecided) == iprefix)
        low = alive & ((col & bit) == 0)
        cnt0 = jnp.sum(jnp.where(low, 1.0, 0.0), axis=-1, keepdims=True)
        take0 = cnt0 >= irem
        iprefix = jnp.where(take0, iprefix, iprefix | bit)
        irem = jnp.where(take0, irem, irem - cnt0)
        return iprefix, idecided | bit, irem

    iprefix, _, _ = lax.fori_loop(0, nbits, idx_body, (zeros, zeros, rem), unroll=4)
    return above | (equal & (col <= iprefix))


def _topk_mask_kernel(x_ref, o_ref, *, k: int, packed: bool, use_radix: bool,
                      needs_guard: bool):
    x = x_ref[...]
    d = x.shape[1]
    col = lax.broadcasted_iota(jnp.int32, (1, d), dimension=1)   # hoisted once, (1, d)
    key = _ordered_key(x, col, packed)
    if use_radix:
        selected = _radix_select(key, col, k, packed)
    else:
        selected = _argmax_select(key, col, k, packed, needs_guard)
    # Multiply (not select) so inf/NaN propagation matches `x * gate` exactly.
    o_ref[...] = x * selected.astype(x.dtype)


def _round_up(a: int, b: int) -> int:
    return ((a + b - 1) // b) * b


def _vmem_capacity_bytes() -> int:
    try:
        return int(pltpu.get_tpu_info().vmem_capacity_bytes)
    except Exception:   # interpret mode / older runtimes: assume v5e/v6e-class
        return 128 << 20


def _plan_tiles(rows: int, d: int, itemsize: int):
    """Row-tile size and VMEM limit, budgeted per TPU generation.

    Budgets the double-buffered in+out blocks plus ~6 int32-wide in-kernel
    temporaries (keys / compares / masks) so peak VMEM stays well inside the
    physical capacity — critical on v7x where VMEM is 64 MiB while the faster
    HBM (~3.2 TB/s) wants bigger blocks to amortize per-grid-step overhead.
    """
    vmem = _vmem_capacity_bytes()
    small_vmem = vmem <= (96 << 20)                 # v7x-class part
    block_target = (5 << 20) if small_vmem else (3 << 20)
    # v7x shards the "parallel" axis across 2 TensorCores -> keep >= 8 steps;
    # single-TC parts only need a few steps to keep the DMA pipeline fed.
    min_steps = 8 if small_vmem else 3
    budget = max(8 << 20, vmem // 2 - (4 << 20))

    sublane = max(8, 32 // itemsize)                # 8 f32, 16 bf16, 32 int8
    per_row = d * (4 * itemsize + 24)               # 2x(in+out) buffers + temps
    tm_budget = max(1, budget // per_row)
    tm_target = max(1, block_target // (d * itemsize))
    tm_steps = (rows + min_steps - 1) // min_steps
    tm = max(sublane, _round_up(min(tm_budget, tm_target, tm_steps), sublane))

    vmem_need = tm * per_row + (2 << 20)
    vmem_limit = int(min(max(vmem_need, 32 << 20), vmem - (4 << 20)))
    return tm, vmem_limit


def _can_pack(dt, d: int) -> bool:
    if d > 0xFFFF:
        return False
    if dt == jnp.dtype(jnp.bfloat16):
        return True
    return bool(jnp.issubdtype(dt, jnp.integer)) and dt.itemsize <= 2


def topk_forward(x: jax.Array, k: int) -> jax.Array:
    """Apply TopK along the last axis of x (any rank >= 1)."""
    orig_shape = x.shape
    d = orig_shape[-1]
    if k > d:
        raise ValueError(f"k={k} is larger than the last dimension d={d}")
    if k <= 0:
        return jnp.zeros_like(x)
    if k == d:                        # every entry kept; gate is all ones
        return x

    rows = math.prod(orig_shape[:-1]) if len(orig_shape) > 1 else 1
    x2 = x.reshape(rows, d)
    dt = jnp.dtype(x.dtype)

    packed = _can_pack(dt, d)
    # lane-reduce cost: argmax loop = (1 if packed else 2) per kept element;
    # radix select = 32 bit-planes (+ ceil(log2 d) tie fix-up if keys not unique)
    loop_cost = k if packed else 2 * k
    radix_cost = 32 if packed else 32 + max(1, (d - 1).bit_length())
    use_radix = loop_cost > radix_cost + 4
    needs_guard = (not packed) and bool(jnp.issubdtype(dt, jnp.integer)) and dt.itemsize >= 4

    tm, vmem_limit = _plan_tiles(rows, d, dt.itemsize)

    # No host-side pad/slice: the grid covers rows with a possibly ragged last
    # block (reads padded, writes clipped).  Rows are independent, so garbage
    # rows in the padded tail are harmless and never written back to HBM.
    grid = (pl.cdiv(rows, tm),)

    # TODO(synk): for d < 128, pack 128//d logical rows per lane row (masked
    # pltpu.roll reduction tree) so compute and output stores are lane-dense.
    # TODO(synk): for huge d where even `sublane` rows overflow VMEM, add a
    # second "arbitrary" grid axis over d with per-chunk local top-k + merge.
    out = pl.pallas_call(
        functools.partial(_topk_mask_kernel, k=k, packed=packed,
                          use_radix=use_radix, needs_guard=needs_guard),
        out_shape=jax.ShapeDtypeStruct((rows, d), x.dtype),
        grid_spec=pltpu.PrefetchScalarGridSpec(
            num_scalar_prefetch=0,
            grid=grid,
            in_specs=[pl.BlockSpec((tm, d), lambda i: (i, 0))],
            out_specs=pl.BlockSpec((tm, d), lambda i: (i, 0)),
        ),
        compiler_params=pltpu.CompilerParams(
            dimension_semantics=("parallel",),
            vmem_limit_bytes=vmem_limit,
        ),
    )(x2)
    return out.reshape(orig_shape)


def _topk_reference(x: jax.Array, k: int) -> jax.Array:
    """Pure-JAX reference with the torch module's semantics."""
    _, idx = lax.top_k(x, k)
    gate = jax.nn.one_hot(idx, x.shape[-1], dtype=x.dtype).sum(axis=-2)
    return x * gate


if __name__ == "__main__":
    key = jax.random.PRNGKey(0)
    batch, seq, hidden = 2, 8, 32
    k = 4
    x = jax.random.normal(key, (batch, seq, hidden), dtype=jnp.float32)

    y = jax.block_until_ready(topk_forward(x, k))
    y_ref = _topk_reference(x, k)
    assert y.shape == x.shape and y.dtype == x.dtype
    assert jnp.allclose(y, y_ref, atol=1e-6), "mismatch vs reference (f32 loop path)"

    # ragged row count (exercises clipped last block) + larger d
    x2 = jax.random.normal(jax.random.PRNGKey(1), (3, 37, 256), dtype=jnp.float32)
    y2 = jax.block_until_ready(topk_forward(x2, 7))
    assert jnp.allclose(y2, _topk_reference(x2, 7), atol=1e-6), "mismatch (ragged)"

    # radix-select path (f32, large k)
    x3 = jax.random.normal(jax.random.PRNGKey(2), (4, 16, 128), dtype=jnp.float32)
    y3 = jax.block_until_ready(topk_forward(x3, 40))
    assert jnp.allclose(y3, _topk_reference(x3, 40), atol=1e-6), "mismatch (radix f32)"

    # packed-key argmax path (bf16, distinct values so tie-breaking is moot)
    vals4 = (jnp.arange(64, dtype=jnp.float32) - 32.0).astype(jnp.bfloat16)
    perm4 = jax.random.permutation(jax.random.PRNGKey(3), 64)
    x4 = jnp.tile(vals4[perm4][None, None, :], (2, 8, 1))
    y4 = jax.block_until_ready(topk_forward(x4, 5))
    assert jnp.array_equal(y4, _topk_reference(x4, 5)), "mismatch (packed bf16 loop)"

    # packed-key radix path (bf16, large k)
    vals5 = (jnp.arange(128, dtype=jnp.float32) - 64.0).astype(jnp.bfloat16)
    perm5 = jax.random.permutation(jax.random.PRNGKey(4), 128)
    x5 = jnp.tile(vals5[perm5][None, None, :], (2, 4, 1))
    y5 = jax.block_until_ready(topk_forward(x5, 48))
    assert jnp.array_equal(y5, _topk_reference(x5, 48)), "mismatch (packed bf16 radix)"

    print("KERNEL_OK")
</pallas_src>

<mosaic_0001>
module attributes {stable_mosaic.version = 11 : i64} {
  func.func @_topk_mask_kernel(%arg0: i32, %arg1: memref<8x32xf32, #tpu.memory_space<vmem>>, %arg2: memref<8x32xf32, #tpu.memory_space<vmem>>) attributes {dimension_semantics = [#tpu.dimension_semantics<parallel>], iteration_bounds = array<i64: 2>, scalar_prefetch = 0 : i64, scratch_operands = 0 : i64, tpu.core_type = #tpu.core_type<tc>, window_params = [{transform_indices = @transform_0, window_bounds = array<i64: 8, 32>}, {transform_indices = @transform_1, window_bounds = array<i64: 8, 32>}]} {
    %c0 = arith.constant 0 : index
    %c0_0 = arith.constant 0 : index
    %0 = vector.load %arg1[%c0, %c0_0] : memref<8x32xf32, #tpu.memory_space<vmem>>, vector<8x32xf32>
    %1 = tpu.iota {dimensions = array<i32: 1>} : vector<1x32xi32>
    %2 = tpu.bitcast %0 : vector<8x32xf32> -> vector<8x32xi32>
    %c0_i32 = arith.constant 0 : i32
    %3 = vector.broadcast %c0_i32 : i32 to vector<8x32xi32>
    %4 = arith.cmpi sge, %2, %3 : vector<8x32xi32>
    %c2147483647_i32 = arith.constant 2147483647 : i32
    %5 = vector.broadcast %c2147483647_i32 : i32 to vector<8x32xi32>
    %6 = arith.xori %2, %5 : vector<8x32xi32>
    %7 = arith.select %4, %2, %6 : vector<8x32xi1>, vector<8x32xi32>
    %8 = arith.cmpf one, %0, %0 : vector<8x32xf32>
    %c2147483647_i32_1 = arith.constant 2147483647 : i32
    %9 = vector.broadcast %c2147483647_i32_1 : i32 to vector<8x32xi32>
    %10 = arith.select %8, %9, %7 : vector<8x32xi1>, vector<8x32xi32>
    %false = arith.constant false
    %11 = vector.broadcast %false : i1 to vector<8x32xi1>
    %c-2147483648_i32 = arith.constant -2147483648 : i32
    %c0_i32_2 = arith.constant 0 : i32
    %12 = vector.broadcast %c-2147483648_i32 : i32 to vector<8x32xi32>
    %13 = arith.select %11, %12, %10 : vector<8x32xi1>, vector<8x32xi32>
    %cst = arith.constant dense<-2147483648> : vector<8xi32>
    %14 = vector.multi_reduction <maxsi>, %13, %cst [1] : vector<8x32xi32> to vector<8xi32>
    %15 = vector.shape_cast %14 : vector<8xi32> to vector<8x1xi32>
    %16 = vector.broadcast %15 : vector<8x1xi32> to vector<8x32xi32>
    %17 = arith.cmpi eq, %13, %16 : vector<8x32xi32>
    %c32_i32 = arith.constant 32 : i32
    %18 = vector.shape_cast %1 : vector<1x32xi32> to vector<1x32xi32>
    %19 = vector.broadcast %18 : vector<1x32xi32> to vector<8x32xi32>
    %20 = vector.broadcast %c32_i32 : i32 to vector<8x32xi32>
    %21 = arith.select %17, %19, %20 : vector<8x32xi1>, vector<8x32xi32>
    %cst_3 = arith.constant dense<2147483647> : vector<8xi32>
    %22 = vector.multi_reduction <minsi>, %21, %cst_3 [1] : vector<8x32xi32> to vector<8xi32>
    %23 = vector.shape_cast %22 : vector<8xi32> to vector<8x1xi32>
    %24 = vector.broadcast %1 : vector<1x32xi32> to vector<8x32xi32>
    %25 = vector.broadcast %23 : vector<8x1xi32> to vector<8x32xi32>
    %26 = arith.cmpi eq, %24, %25 : vector<8x32xi32>
    %27 = arith.ori %11, %26 : vector<8x32xi1>
    %c1_i32 = arith.constant 1 : i32
    %28 = vector.broadcast %c-2147483648_i32 : i32 to vector<8x32xi32>
    %29 = arith.select %27, %28, %10 : vector<8x32xi1>, vector<8x32xi32>
    %cst_4 = arith.constant dense<-2147483648> : vector<8xi32>
    %30 = vector.multi_reduction <maxsi>, %29, %cst_4 [1] : vector<8x32xi32> to vector<8xi32>
    %31 = vector.shape_cast %30 : vector<8xi32> to vector<8x1xi32>
    %32 = vector.broadcast %31 : vector<8x1xi32> to vector<8x32xi32>
    %33 = arith.cmpi eq, %29, %32 : vector<8x32xi32>
    %c32_i32_5 = arith.constant 32 : i32
    %34 = vector.shape_cast %1 : vector<1x32xi32> to vector<1x32xi32>
    %35 = vector.broadcast %34 : vector<1x32xi32> to vector<8x32xi32>
    %36 = vector.broadcast %c32_i32_5 : i32 to vector<8x32xi32>
    %37 = arith.select %33, %35, %36 : vector<8x32xi1>, vector<8x32xi32>
    %cst_6 = arith.constant dense<2147483647> : vector<8xi32>
    %38 = vector.multi_reduction <minsi>, %37, %cst_6 [1] : vector<8x32xi32> to vector<8xi32>
    %39 = vector.shape_cast %38 : vector<8xi32> to vector<8x1xi32>
    %40 = vector.broadcast %1 : vector<1x32xi32> to vector<8x32xi32>
    %41 = vector.broadcast %39 : vector<8x1xi32> to vector<8x32xi32>
    %42 = arith.cmpi eq, %40, %41 : vector<8x32xi32>
    %43 = arith.ori %27, %42 : vector<8x32xi1>
    %c2_i32 = arith.constant 2 : i32
    %44 = vector.broadcast %c-2147483648_i32 : i32 to vector<8x32xi32>
    %45 = arith.select %43, %44, %10 : vector<8x32xi1>, vector<8x32xi32>
    %cst_7 = arith.constant dense<-2147483648> : vector<8xi32>
    %46 = vector.multi_reduction <maxsi>, %45, %cst_7 [1] : vector<8x32xi32> to vector<8xi32>
    %47 = vector.shape_cast %46 : vector<8xi32> to vector<8x1xi32>
    %48 = vector.broadcast %47 : vector<8x1xi32> to vector<8x32xi32>
    %49 = arith.cmpi eq, %45, %48 : vector<8x32xi32>
    %c32_i32_8 = arith.constant 32 : i32
    %50 = vector.shape_cast %1 : vector<1x32xi32> to vector<1x32xi32>
    %51 = vector.broadcast %50 : vector<1x32xi32> to vector<8x32xi32>
    %52 = vector.broadcast %c32_i32_8 : i32 to vector<8x32xi32>
    %53 = arith.select %49, %51, %52 : vector<8x32xi1>, vector<8x32xi32>
    %cst_9 = arith.constant dense<2147483647> : vector<8xi32>
    %54 = vector.multi_reduction <minsi>, %53, %cst_9 [1] : vector<8x32xi32> to vector<8xi32>
    %55 = vector.shape_cast %54 : vector<8xi32> to vector<8x1xi32>
    %56 = vector.broadcast %1 : vector<1x32xi32> to vector<8x32xi32>
    %57 = vector.broadcast %55 : vector<8x1xi32> to vector<8x32xi32>
    %58 = arith.cmpi eq, %56, %57 : vector<8x32xi32>
    %59 = arith.ori %43, %58 : vector<8x32xi1>
    %c3_i32 = arith.constant 3 : i32
    %60 = vector.broadcast %c-2147483648_i32 : i32 to vector<8x32xi32>
    %61 = arith.select %59, %60, %10 : vector<8x32xi1>, vector<8x32xi32>
    %cst_10 = arith.constant dense<-2147483648> : vector<8xi32>
    %62 = vector.multi_reduction <maxsi>, %61, %cst_10 [1] : vector<8x32xi32> to vector<8xi32>
    %63 = vector.shape_cast %62 : vector<8xi32> to vector<8x1xi32>
    %64 = vector.broadcast %63 : vector<8x1xi32> to vector<8x32xi32>
    %65 = arith.cmpi eq, %61, %64 : vector<8x32xi32>
    %c32_i32_11 = arith.constant 32 : i32
    %66 = vector.shape_cast %1 : vector<1x32xi32> to vector<1x32xi32>
    %67 = vector.broadcast %66 : vector<1x32xi32> to vector<8x32xi32>
    %68 = vector.broadcast %c32_i32_11 : i32 to vector<8x32xi32>
    %69 = arith.select %65, %67, %68 : vector<8x32xi1>, vector<8x32xi32>
    %cst_12 = arith.constant dense<2147483647> : vector<8xi32>
    %70 = vector.multi_reduction <minsi>, %69, %cst_12 [1] : vector<8x32xi32> to vector<8xi32>
    %71 = vector.shape_cast %70 : vector<8xi32> to vector<8x1xi32>
    %72 = vector.broadcast %1 : vector<1x32xi32> to vector<8x32xi32>
    %73 = vector.broadcast %71 : vector<8x1xi32> to vector<8x32xi32>
    %74 = arith.cmpi eq, %72, %73 : vector<8x32xi32>
    %75 = arith.ori %59, %74 : vector<8x32xi1>
    %76 = arith.extui %75 : vector<8x32xi1> to vector<8x32xi32>
    %77 = arith.sitofp %76 : vector<8x32xi32> to vector<8x32xf32>
    %78 = arith.mulf %0, %77 : vector<8x32xf32>
    %c0_13 = arith.constant 0 : index
    %c0_14 = arith.constant 0 : index
    %79 = vector.load %arg2[%c0_13, %c0_14] : memref<8x32xf32, #tpu.memory_space<vmem>>, vector<8x32xf32>
    tpu.vector_store %arg2[%c0_13, %c0_14], %78 {strides = array<i32>} : memref<8x32xf32, #tpu.memory_space<vmem>>, vector<8x32xf32>,
    return
  }
  func.func @transform_0(%arg0: i32) -> (i32, i32) {
    %c0_i32 = arith.constant 0 : i32
    %c0_i32_0 = arith.constant 0 : i32
    return %arg0, %c0_i32 : i32, i32
  }
  func.func @transform_1(%arg0: i32) -> (i32, i32) {
    %c0_i32 = arith.constant 0 : i32
    %c0_i32_0 = arith.constant 0 : i32
    return %arg0, %c0_i32 : i32, i32
  }
}

</mosaic_0001>

<llo_original>
// kernel: tpu_custom_call.1
$region0: #{tpu_custom_call.1}
  #allocation0 [shape = 'u32[]', space=smem, size = 0x4, offset = 0x4, fixed_abs, tag = 'smem constant byte address 0x4 - core index']
  #allocation1 [shape = 'u32[144,128]{1,0:T(1,128)}', space=vmem, size = 0x12000, scoped, tag = 'internal scratch']
  %s0 = inlined_call_operand.hbm [shape: f32[16,32], index: 0, kind: input, shape index: {}]
  %s1 = inlined_call_operand.hbm [shape: f32[16,32], index: 1, kind: output, shape index: {}]
  %s2 = sld [smem:[#allocation0]]
  $region41: #{tpu_custom_call.1} parent=0
    _
  %s4 = ssub.s32 1, %s2
  %s5 = scalar_select 0, %s4, %s2
  $region1: #{tpu_custom_call.1} parent=0
    #allocation2 [shape = 'u8[8192]{0}', space=vmem, size = 0x2000, scoped, tag = 'input window, operand 0']
    #allocation3 [shape = 's32[2]{0}', space=sflag, size = 0x8, scoped, tag = 'scoped memory for tpu_custom_call.1']
    #allocation4 [shape = 's32[2]{0}', space=sflag, size = 0x8, scoped, tag = 'scoped memory for tpu_custom_call.1']
    #allocation5 [shape = 'u8[8192]{0}', space=vmem, size = 0x2000, scoped, tag = 'output window, operand 0']
    %6 = vsyncpa [#allocation3], 0
    %s7 = scalar_lea.sflag [#allocation3], 1
    %8 = vsyncpa %s7, 0
    %9 = vsyncpa [#allocation4], 0
    %s10 = scalar_lea.sflag [#allocation4], 1
    %11 = vsyncpa %s10, 0
    loop: start=0, step=1, limit=4
    $region2: #{tpu_custom_call.1} parent=1 // loop_pre_header
      _
    $region3: #{tpu_custom_call.1} parent=1 // loop_header
      %s13 = sphi 0, %s17
      %p14 = scmp.ge.s32.totalorder %s13, 4
      %s23 = sphi 0, %s25
      %s26 = sphi 0, %s23
      %s27 = sphi 0, %s26
      %s43 = sphi 0, %s27
      %s49 = sphi 0, %s51
      %s52 = sphi 0, %s49
      %s53 = sphi 0, %s52
      %s69 = sphi 0, %s53
    $region4: #{tpu_custom_call.1} parent=1 // loop_header_branch
      %16 = sbr.rel (%p14) target = $region8
    $region5: #{tpu_custom_call.1} parent=1 // loop_body
      %s18 = ssub.s32 %s13, 1
      %s19 = ssub.s32 %s13, 2
      %s20 = sadd.s32 %s13, 1
      %s21 = ssub.s32 %s13, %s20
      %p22 = scmp.eq.s32.totalorder %s21, 0
      %s24 = sadd.s32 %s23, 1
      %s25 = scalar_select %p22, %s23, %s24
      %p28 = pneg %p22
      %p29 = scmp.eq.s32.totalorder %s13, 1
      %p30 = por %p28, %p29
      %p31 = scmp.ne.s32.totalorder %s23, %s26
      %p32 = scmp.eq.s32.totalorder %s13, 0
      %p33 = por %p31, %p32
      %p34 = scmp.ne.s32.totalorder %s23, %s26
      %p35 = scmp.eq.s32.totalorder %s18, 1
      %p36 = por %p34, %p35
      %p37 = scmp.ne.s32.totalorder %s26, %s27
      %p38 = scmp.eq.s32.totalorder %s18, 0
      %p39 = por %p37, %p38
      %p40 = scmp.ne.s32.totalorder %s26, %s27
      %p41 = scmp.eq.s32.totalorder %s19, 1
      %p42 = por %p40, %p41
      %p44 = scmp.ne.s32.totalorder %s27, %s43
      %p45 = scmp.eq.s32.totalorder %s19, 0
      %p46 = por %p44, %p45
      %s47 = ssub.s32 %s13, %s20
      %p48 = scmp.eq.s32.totalorder %s47, 0
      %s50 = sadd.s32 %s49, 1
      %s51 = scalar_select %p48, %s49, %s50
      %p54 = pneg %p48
      %p55 = scmp.eq.s32.totalorder %s13, 1
      %p56 = por %p54, %p55
      %p57 = scmp.ne.s32.totalorder %s49, %s52
      %p58 = scmp.eq.s32.totalorder %s13, 0
      %p59 = por %p57, %p58
      %p60 = scmp.ne.s32.totalorder %s49, %s52
      %p61 = scmp.eq.s32.totalorder %s18, 1
      %p62 = por %p60, %p61
      %p63 = scmp.ne.s32.totalorder %s52, %s53
      %p64 = scmp.eq.s32.totalorder %s18, 0
      %p65 = por %p63, %p64
      %p66 = scmp.ne.s32.totalorder %s52, %s53
      %p67 = scmp.eq.s32.totalorder %s19, 1
      %p68 = por %p66, %p67
      %p70 = scmp.ne.s32.totalorder %s53, %s69
      %p71 = scmp.eq.s32.totalorder %s19, 0
      %p72 = por %p70, %p71
      %p73 = scmp.le.s32.totalorder 1, %s13
      %p74 = scmp.lt.s32.totalorder %s13, 3
      %p75 = pnand %p73, %p74
      %p76 = pneg %p75
      // Predicated region
      $region9: #{tpu_custom_call.1} parent=5 // pred_check
        _
      $region10: #{tpu_custom_call.1} parent=5 // pred_check_branch
        %78 = sbr.rel (%p75) target = $region12
      $region11: #{tpu_custom_call.1} parent=5 // pred_region
        %s79 = ssub.s32 %s13, 1
      $region12: #{tpu_custom_call.1} parent=5 // pred_fallthru
        _
      %p80 = scmp.lt.s32.totalorder %s13, 2
      // Predicated region
      $region13: #{tpu_custom_call.1} parent=5 // pred_check
        %p81 = pneg %p80
      $region14: #{tpu_custom_call.1} parent=5 // pred_check_branch
        %83 = sbr.rel (%p81) target = $region16
      $region15: #{tpu_custom_call.1} parent=5 // pred_region
        // Predicated region
        $region17: #{tpu_custom_call.1} parent=15 // pred_check
          %p84 = pneg %p33
        $region18: #{tpu_custom_call.1} parent=15 // pred_check_branch
          %86 = sbr.rel (%p84) target = $region20
        $region19: #{tpu_custom_call.1} parent=15 // pred_region
          %s87 = sand.u32 %s23, 1
          %s88 = scalar_lea.sflag [#allocation3], %s87
          %s89 = sand.u32 %s23, 1
          %s90 = smul.addr %s89, 8
          %s91 = scalar_lea.vmem [#allocation2], %s90
          %s93 = ssub.s32 128, 128
          %94 = vsyncadd %s88, %s93
          %s95 = smul.addr %s13, 128
          %s96 = scalar_lea.hbm %s0, %s95
          %s98 = sshll.u32 %s91, 4
          %s99 = int_to_ptr.vmem [resolvable:$true] %s98
          %101 = dma.hbm_to_vmem [thread:$0]  %s96, 128, %s99, %s88
        $region20: #{tpu_custom_call.1} parent=15 // pred_fallthru
          _
      $region16: #{tpu_custom_call.1} parent=5 // pred_fallthru
        _
      %p102 = scmp.le.s32.totalorder 1, %s13
      %p103 = scmp.lt.s32.totalorder %s13, 3
      %p104 = pnand %p102, %p103
      %p105 = pneg %p104
      // Predicated region
      $region21: #{tpu_custom_call.1} parent=5 // pred_check
        _
      $region22: #{tpu_custom_call.1} parent=5 // pred_check_branch
        %107 = sbr.rel (%p104) target = $region24
      $region23: #{tpu_custom_call.1} parent=5 // pred_region
        %s108 = ssub.s32 %s13, 1
        %s109 = sand.u32 %s26, 1
        %s110 = scalar_lea.sflag [#allocation3], %s109
        %s111 = sand.u32 %s26, 1
        %s112 = smul.addr %s111, 8
        %s113 = scalar_lea.vmem [#allocation2], %s112
        // Predicated region
        $region25: #{tpu_custom_call.1} parent=23 // pred_check
          %p114 = pneg %p39
        $region26: #{tpu_custom_call.1} parent=23 // pred_check_branch
          %116 = sbr.rel (%p114) target = $region28
        $region27: #{tpu_custom_call.1} parent=23 // pred_region
          %117 = dma.done %s110, 128
        $region28: #{tpu_custom_call.1} parent=23 // pred_fallthru
          _
        %s118 = sand.u32 %s26, 1
        %s119 = scalar_lea.sflag [#allocation3], %s118
        %s120 = sand.u32 %s26, 1
        %s121 = smul.addr %s120, 8
        %s122 = scalar_lea.vmem [#allocation2], %s121
        %p123 = pneg %p39
        %p124 = pneg %p36
        %p125 = pneg %p65
        %p126 = pneg %p62
        %s127 = sand.u32 %s52, 1
        %s128 = scalar_lea.sflag [#allocation4], %s127
        %s129 = sand.u32 %s52, 1
        %s130 = smul.addr %s129, 8
        %s131 = scalar_lea.vmem [#allocation5], %s130
        %v132 = vld [vmem:[%s113] sm:$0xff]
        %v133 = vlaneseq
        %v134 = vand.u32 %v133, 127
        %vm136 = vcmp.ge.s32.totalorder %v132, 0
        %v137 = vxor.u32 %v132, 2147483647
        %v138 = vsel %vm136, %v132, %v137
        %vm139 = vcmp.ne.f32.partialorder %v132, %v132
        %v140 = vsel %vm139, 2147483647, %v138
        %vm141 = vcmask 261120
        %v142 = vsel %vm141, %v140, 2147483648
        %v143 = vand.u32 %v142, 65535
        %v144 = vshra.s32 %v142, 16
        %v145 = vcvt.s32.f32 %v143
        %v146 = vcvt.s32.f32 %v144
        %147 = vmax.xlane.f32.xlu0 %v146
        %v148 = vpop.xlane.xlu0 %147
        %vm149 = vcmp.eq.f32.partialorder %v146, %v148
        %v150 = vsel %vm149, %v145, -inf
        %151 = vmax.xlane.f32.xlu0 %v150
        %v152 = vpop.xlane.xlu0 %151
        %v153 = vcvt.f32.s32 %v152
        %v154 = vcvt.f32.s32 %v148
        %v155 = vshll.u32 %v154, 16
        %v156 = vadd.s32 %v155, %v153
        %vm157 = vcmp.eq.s32.totalorder %v140, %v156
        %v158 = vsel %vm157, %v134, 32
        %v159 = vsel %vm141, %v158, 2147483647
        %v160 = vand.u32 %v159, 65535
        %v161 = vshra.s32 %v159, 16
        %v162 = vcvt.s32.f32 %v160
        %v163 = vcvt.s32.f32 %v161
        %164 = vmin.xlane.f32.xlu0 %v163
        %v165 = vpop.xlane.xlu0 %164
        %vm166 = vcmp.eq.f32.partialorder %v163, %v165
        %v167 = vsel %vm166, %v162, inf
        %168 = vmin.xlane.f32.xlu0 %v167
        %v169 = vpop.xlane.xlu0 %168
        %v170 = vcvt.f32.s32 %v169
        %v171 = vcvt.f32.s32 %v165
        %v172 = vshll.u32 %v171, 16
        %v173 = vadd.s32 %v172, %v170
        %vm174 = vcmp.eq.s32.totalorder %v134, %v173
        %v175 = vsel %vm174, 2147483648, %v140
        %v176 = vsel %vm141, %v175, 2147483648
        %v177 = vand.u32 %v176, 65535
        %v178 = vshra.s32 %v176, 16
        %v179 = vcvt.s32.f32 %v177
        %v180 = vcvt.s32.f32 %v178
        %181 = vmax.xlane.f32.xlu0 %v180
        %v182 = vpop.xlane.xlu0 %181
        %vm183 = vcmp.eq.f32.partialorder %v180, %v182
        %v184 = vsel %vm183, %v179, -inf
        %185 = vmax.xlane.f32.xlu0 %v184
        %v186 = vpop.xlane.xlu0 %185
        %v187 = vcvt.f32.s32 %v186
        %v188 = vcvt.f32.s32 %v182
        %v189 = vshll.u32 %v188, 16
        %v190 = vadd.s32 %v189, %v187
        %vm191 = vcmp.eq.s32.totalorder %v175, %v190
        %v192 = vsel %vm191, %v134, 32
        %v193 = vsel %vm141, %v192, 2147483647
        %v194 = vand.u32 %v193, 65535
        %v195 = vshra.s32 %v193, 16
        %v196 = vcvt.s32.f32 %v194
        %v197 = vcvt.s32.f32 %v195
        %198 = vmin.xlane.f32.xlu0 %v197
        %v199 = vpop.xlane.xlu0 %198
        %vm200 = vcmp.eq.f32.partialorder %v197, %v199
        %v201 = vsel %vm200, %v196, inf
        %202 = vmin.xlane.f32.xlu0 %v201
        %v203 = vpop.xlane.xlu0 %202
        %v204 = vcvt.f32.s32 %v203
        %v205 = vcvt.f32.s32 %v199
        %v206 = vshll.u32 %v205, 16
        %v207 = vadd.s32 %v206, %v204
        %vm208 = vcmp.eq.s32.totalorder %v134, %v207
        %vm209 = vmor %vm174, %vm208
        %v210 = vsel %vm209, 2147483648, %v140
        %v211 = vsel %vm141, %v210, 2147483648
        %v212 = vand.u32 %v211, 65535
        %v213 = vshra.s32 %v211, 16
        %v214 = vcvt.s32.f32 %v212
        %v215 = vcvt.s32.f32 %v213
        %216 = vmax.xlane.f32.xlu0 %v215
        %v217 = vpop.xlane.xlu0 %216
        %vm218 = vcmp.eq.f32.partialorder %v215, %v217
        %v219 = vsel %vm218, %v214, -inf
        %220 = vmax.xlane.f32.xlu0 %v219
        %v221 = vpop.xlane.xlu0 %220
        %v222 = vcvt.f32.s32 %v221
        %v223 = vcvt.f32.s32 %v217
        %v224 = vshll.u32 %v223, 16
        %v225 = vadd.s32 %v224, %v222
        %vm226 = vcmp.eq.s32.totalorder %v210, %v225
        %v227 = vsel %vm226, %v134, 32
        %v228 = vsel %vm141, %v227, 2147483647
        %v229 = vand.u32 %v228, 65535
        %v230 = vshra.s32 %v228, 16
        %v231 = vcvt.s32.f32 %v229
        %v232 = vcvt.s32.f32 %v230
        %233 = vmin.xlane.f32.xlu0 %v232
        %v234 = vpop.xlane.xlu0 %233
        %vm235 = vcmp.eq.f32.partialorder %v232, %v234
        %v236 = vsel %vm235, %v231, inf
        %237 = vmin.xlane.f32.xlu0 %v236
        %v238 = vpop.xlane.xlu0 %237
        %v239 = vcvt.f32.s32 %v238
        %v240 = vcvt.f32.s32 %v234
        %v241 = vshll.u32 %v240, 16
        %v242 = vadd.s32 %v241, %v239
        %vm243 = vcmp.eq.s32.totalorder %v134, %v242
        %vm244 = vmor %vm209, %vm243
        %v245 = vsel %vm244, 2147483648, %v140
        %v246 = vsel %vm141, %v245, 2147483648
        %v247 = vand.u32 %v246, 65535
        %v248 = vshra.s32 %v246, 16
        %v249 = vcvt.s32.f32 %v247
        %v250 = vcvt.s32.f32 %v248
        %251 = vmax.xlane.f32.xlu0 %v250
        %v252 = vpop.xlane.xlu0 %251
        %vm253 = vcmp.eq.f32.partialorder %v250, %v252
        %v254 = vsel %vm253, %v249, -inf
        %255 = vmax.xlane.f32.xlu0 %v254
        %v256 = vpop.xlane.xlu0 %255
        %v257 = vcvt.f32.s32 %v256
        %v258 = vcvt.f32.s32 %v252
        %v259 = vshll.u32 %v258, 16
        %v260 = vadd.s32 %v259, %v257
        %vm261 = vcmp.eq.s32.totalorder %v245, %v260
        %v262 = vsel %vm261, %v134, 32
        %v263 = vsel %vm141, %v262, 2147483647
        %v264 = vand.u32 %v263, 65535
        %v265 = vshra.s32 %v263, 16
        %v266 = vcvt.s32.f32 %v264
        %v267 = vcvt.s32.f32 %v265
        %268 = vmin.xlane.f32.xlu0 %v267
        %v269 = vpop.xlane.xlu0 %268
        %vm270 = vcmp.eq.f32.partialorder %v267, %v269
        %v271 = vsel %vm270, %v266, inf
        %272 = vmin.xlane.f32.xlu0 %v271
        %v273 = vpop.xlane.xlu0 %272
        %v274 = vcvt.f32.s32 %v273
        %v275 = vcvt.f32.s32 %v269
        %v276 = vshll.u32 %v275, 16
        %v277 = vadd.s32 %v276, %v274
        %vm278 = vcmp.eq.s32.totalorder %v134, %v277
        %vm279 = vmor %vm244, %vm278
        %v280 = vsel %vm279, 1, 0
        %v281 = vcvt.s32.f32 %v280
        %v282 = vmul.f32 %v132, %v281
        %283 = vst.msk [vmem:[%s131] sm:$0xff] %vm141, %v282
        %s284 = sand.u32 %s52, 1
        %s285 = scalar_lea.sflag [#allocation4], %s284
        %s286 = sand.u32 %s52, 1
        %s287 = smul.addr %s286, 8
        %s288 = scalar_lea.vmem [#allocation5], %s287
        // Predicated region
        $region29: #{tpu_custom_call.1} parent=23 // pred_check
          %p289 = pneg %p62
        $region30: #{tpu_custom_call.1} parent=23 // pred_check_branch
          %291 = sbr.rel (%p289) target = $region32
        $region31: #{tpu_custom_call.1} parent=23 // pred_region
          %s293 = ssub.s32 128, 128
          %294 = vsyncadd %s285, %s293
          %s295 = smul.addr %s18, 128
          %s296 = scalar_lea.hbm %s1, %s295
          %s298 = sshll.u32 %s288, 4
          %s299 = int_to_ptr.vmem [resolvable:$true] %s298
          %301 = dma.vmem_to_hbm [thread:$0]  %s299, 128, %s296, %s285
        $region32: #{tpu_custom_call.1} parent=23 // pred_fallthru
          _
      $region24: #{tpu_custom_call.1} parent=5 // pred_fallthru
        _
      %p302 = scmp.le.s32.totalorder 2, %s13
      // Predicated region
      $region33: #{tpu_custom_call.1} parent=5 // pred_check
        %p303 = pneg %p302
      $region34: #{tpu_custom_call.1} parent=5 // pred_check_branch
        %305 = sbr.rel (%p303) target = $region36
      $region35: #{tpu_custom_call.1} parent=5 // pred_region
        %s306 = ssub.s32 %s13, 2
        // Predicated region
        $region37: #{tpu_custom_call.1} parent=35 // pred_check
          %p307 = pneg %p68
        $region38: #{tpu_custom_call.1} parent=35 // pred_check_branch
          %309 = sbr.rel (%p307) target = $region40
        $region39: #{tpu_custom_call.1} parent=35 // pred_region
          %s310 = sand.u32 %s53, 1
          %s311 = scalar_lea.sflag [#allocation4], %s310
          %s312 = sand.u32 %s53, 1
          %s313 = smul.addr %s312, 8
          %s314 = scalar_lea.vmem [#allocation5], %s313
          %315 = dma.done %s311, 128
        $region40: #{tpu_custom_call.1} parent=35 // pred_fallthru
          _
      $region36: #{tpu_custom_call.1} parent=5 // pred_fallthru
        _
    $region6: #{tpu_custom_call.1} parent=1 // loop_footer
      %s17 = sadd.s32 1, %s13
    $region7: #{tpu_custom_call.1} parent=1 // loop_footer_branch
      %12 = sbr.rel target = $region3
    $region8: #{tpu_custom_call.1} parent=1 // loop_exit
      _
    %316 = vsyncpa [#allocation3], 1
    %s317 = scalar_lea.sflag [#allocation3], 1
    %318 = vsyncpa %s317, 1
    %319 = vsyncpa [#allocation4], 1
    %s320 = scalar_lea.sflag [#allocation4], 1
    %321 = vsyncpa %s320, 1

</llo_original>
